<compile_context>
chip_gen: v7x
topology: tpu7x:2x2x1
jax: 0.10.0
libtpu: 0.0.40
codegen_flags: <defaults>
</compile_context>

<pallas_src>
import math

import jax
import jax.numpy as jnp
from jax.experimental import pallas as pl
from jax.experimental.pallas import tpu as pltpu


# --------------------------------------------------------------------------
# Fused kernel: recompute the batch-invariant scale/shift rows from the tiny
# MLP weights (free filler on a mem-bound kernel) and apply the affine map to
# one lane-dense batch tile.
# --------------------------------------------------------------------------
def fused_affine_kernel(w1s_ref, b1s_ref, w2s_ref, b2s_ref,
                        w1h_ref, b1h_ref, w2h_ref, b2h_ref,
                        x_ref, z_ref):
    """Shapes:
       w1*_ref, b1*_ref : (1, H)
       w2*_ref          : (H, L)   (pre-tiled along lanes when L = G*D)
       b2*_ref          : (1, L)
       x_ref, z_ref     : (TB, L)
    """
    # ones((1,1)) @ W1 == W1, so the first Linear collapses to W1 + b1.
    hs = jnp.tanh(w1s_ref[...] + b1s_ref[...])
    log_scale = (
        jnp.dot(hs, w2s_ref[...], preferred_element_type=jnp.float32)
        + b2s_ref[...]
    )
    hh = jnp.tanh(w1h_ref[...] + b1h_ref[...])
    shift = (
        jnp.dot(hh, w2h_ref[...], preferred_element_type=jnp.float32)
        + b2h_ref[...]
    )
    z_ref[...] = jnp.exp(log_scale) * x_ref[...] + shift


# --------------------------------------------------------------------------
# Layout / tiling helpers.
# --------------------------------------------------------------------------
def _lane_group(feat):
    """Smallest G such that G*feat is a multiple of 128 (lane-dense width)."""
    if feat % 128 == 0:
        return 1, feat
    g = 128 // math.gcd(feat, 128)
    return g, g * feat


def _vmem_budget():
    """(per-tile byte budget, vmem_limit_bytes) chosen per chip generation."""
    try:
        vmem_cap = pltpu.get_tpu_info().vmem_capacity_bytes
    except Exception:
        vmem_cap = 64 << 20
    if vmem_cap >= (100 << 20):       # v5e / v6e: 128 MiB physical VMEM
        return 5 << 20, 64 << 20      # ~20 MiB total for x+z double buffers
    # v7x: 64 MiB VMEM per TensorCore -> smaller tiles, leave scratch headroom
    return 3 << 20, 28 << 20


def _choose_tile_rows(rows, lane_width, tile_bytes):
    """Batch-tile height: as large as the budget allows, multiple of 8, but
    keep at least 2 grid steps so the 'parallel' axis can feed both v7x TCs."""
    if rows <= 8:
        return rows                                   # single full-extent block
    bytes_per_row = lane_width * 4                    # f32
    tb = max(8, (tile_bytes // bytes_per_row) // 8 * 8)
    tb = min(tb, max(8, (rows // 8) * 8))             # don't exceed the data
    if rows >= 16:
        half = (((rows + 1) // 2) + 7) // 8 * 8
        tb = min(tb, half)                            # >= 2 grid steps
    return tb


# --------------------------------------------------------------------------
# Wrapper: returns (z, log_det) matching the PyTorch module.
# --------------------------------------------------------------------------
def affine_flow_forward(x, params):
    B, D = x.shape
    (w1s, b1s, w2s, b2s, w1h, b1h, w2h, b2h) = params
    H = w1s.shape[1]

    # ---- Lane-dense view: group G batch rows into one (1, L=G*D) lane row.
    G, L = _lane_group(D)
    lane_dense = (G > 1) and (B % G == 0)
    if lane_dense:
        rows = B // G
        x_view = x.reshape(rows, L)                   # row-major, no copy
        w2s_k, b2s_k = jnp.tile(w2s, (1, G)), jnp.tile(b2s, (1, G))
        w2h_k, b2h_k = jnp.tile(w2h, (1, G)), jnp.tile(b2h, (1, G))
    else:
        # Fallback (B not divisible by G, or D already lane-dense).
        rows, L = B, D
        x_view = x
        w2s_k, b2s_k, w2h_k, b2h_k = w2s, b2s, w2h, b2h

    tile_bytes, vmem_limit = _vmem_budget()
    tb = _choose_tile_rows(rows, L, tile_bytes)
    n_steps = pl.cdiv(rows, tb)                       # no padding; Pallas masks
                                                      # the boundary block

    const2d = lambda i: (0, 0)                        # weights: fetched once

    z_view = pl.pallas_call(
        fused_affine_kernel,
        out_shape=jax.ShapeDtypeStruct((rows, L), jnp.float32),
        grid_spec=pltpu.PrefetchScalarGridSpec(
            num_scalar_prefetch=0,
            grid=(n_steps,),
            in_specs=[
                pl.BlockSpec((1, H), const2d),        # w1s
                pl.BlockSpec((1, H), const2d),        # b1s
                pl.BlockSpec((H, L), const2d),        # w2s (lane-tiled)
                pl.BlockSpec((1, L), const2d),        # b2s (lane-tiled)
                pl.BlockSpec((1, H), const2d),        # w1h
                pl.BlockSpec((1, H), const2d),        # b1h
                pl.BlockSpec((H, L), const2d),        # w2h (lane-tiled)
                pl.BlockSpec((1, L), const2d),        # b2h (lane-tiled)
                pl.BlockSpec((tb, L), lambda i: (i, 0)),   # x tile
            ],
            out_specs=pl.BlockSpec((tb, L), lambda i: (i, 0)),
        ),
        compiler_params=pltpu.CompilerParams(
            dimension_semantics=("parallel",),        # megacore-shardable
            vmem_limit_bytes=vmem_limit,
        ),
    )(w1s, b1s, w2s_k, b2s_k, w1h, b1h, w2h_k, b2h_k, x_view)

    z = z_view.reshape(B, D) if lane_dense else z_view

    # log_det is batch-invariant: one tiny (1,H)@(H,D) in the wrapper suffices.
    log_scale_row = jnp.tanh(w1s + b1s) @ w2s + b2s
    log_det = jnp.broadcast_to(jnp.sum(log_scale_row), (B,))
    return z, log_det


# --------------------------------------------------------------------------
# Parameter init mirroring the nn.Linear shapes (weights stored (in, out)).
# --------------------------------------------------------------------------
def init_params(key, input_dim, hidden_dim=16):
    ks = jax.random.split(key, 8)

    def u(k, shape, fan_in):
        bound = 1.0 / jnp.sqrt(jnp.float32(fan_in))
        return jax.random.uniform(k, shape, jnp.float32, -bound, bound)

    # scale_net: Linear(1, H), Linear(H, D)
    w1s = u(ks[0], (1, hidden_dim), 1)
    b1s = u(ks[1], (1, hidden_dim), 1)
    w2s = u(ks[2], (hidden_dim, input_dim), hidden_dim)
    b2s = u(ks[3], (1, input_dim), hidden_dim)
    # shift_net: Linear(1, H), Linear(H, D)
    w1h = u(ks[4], (1, hidden_dim), 1)
    b1h = u(ks[5], (1, hidden_dim), 1)
    w2h = u(ks[6], (hidden_dim, input_dim), hidden_dim)
    b2h = u(ks[7], (1, input_dim), hidden_dim)
    return (w1s, b1s, w2s, b2s, w1h, b1h, w2h, b2h)


def affine_flow_forward_ref(x, params):
    """Pure-JAX reference (mirrors the PyTorch forward exactly)."""
    (w1s, b1s, w2s, b2s, w1h, b1h, w2h, b2h) = params
    B = x.shape[0]
    ones = jnp.ones((B, 1), jnp.float32)
    log_scale = jnp.tanh(ones @ w1s + b1s) @ w2s + b2s
    shift = jnp.tanh(ones @ w1h + b1h) @ w2h + b2h
    z = jnp.exp(log_scale) * x + shift
    return z, jnp.sum(log_scale, axis=1)


if __name__ == "__main__":
    key = jax.random.PRNGKey(0)
    k1, k2, k3, kp = jax.random.split(key, 4)

    input_dim, hidden_dim = 32, 16
    params = init_params(kp, input_dim, hidden_dim)

    cases = (
        ("lane-dense single step", 8, k1),    # (8,32) -> (2,128) slab
        ("lane-dense multi step", 64, k2),    # (64,32) -> (16,128), 2 grid steps
        ("ragged fallback", 10, k3),          # B % 4 != 0 -> (10,32), partial tile
    )
    for name, batch, kx in cases:
        x = jax.random.normal(kx, (batch, input_dim), jnp.float32)
        z, log_det = affine_flow_forward(x, params)
        jax.block_until_ready((z, log_det))
        z_ref, log_det_ref = affine_flow_forward_ref(x, params)
        assert z.shape == (batch, input_dim), name
        assert log_det.shape == (batch,), name
        assert jnp.allclose(z, z_ref, atol=1e-5, rtol=1e-5), name
        assert jnp.allclose(log_det, log_det_ref, atol=1e-5, rtol=1e-5), name

    print("KERNEL_OK")
</pallas_src>

<mosaic_0001>
module attributes {stable_mosaic.version = 11 : i64} {
  func.func @fused_affine_kernel(%arg0: i32, %arg1: memref<1x16xf32, #tpu.memory_space<vmem>>, %arg2: memref<1x16xf32, #tpu.memory_space<vmem>>, %arg3: memref<16x128xf32, #tpu.memory_space<vmem>>, %arg4: memref<1x128xf32, #tpu.memory_space<vmem>>, %arg5: memref<1x16xf32, #tpu.memory_space<vmem>>, %arg6: memref<1x16xf32, #tpu.memory_space<vmem>>, %arg7: memref<16x128xf32, #tpu.memory_space<vmem>>, %arg8: memref<1x128xf32, #tpu.memory_space<vmem>>, %arg9: memref<2x128xf32, #tpu.memory_space<vmem>>, %arg10: memref<2x128xf32, #tpu.memory_space<vmem>>) attributes {dimension_semantics = [#tpu.dimension_semantics<parallel>], iteration_bounds = array<i64: 1>, scalar_prefetch = 0 : i64, scratch_operands = 0 : i64, tpu.core_type = #tpu.core_type<tc>, window_params = [{pipeline_mode = #tpu.pipeline_mode<synchronous>, transform_indices = @transform_0, window_bounds = array<i64: 1, 16>}, {pipeline_mode = #tpu.pipeline_mode<synchronous>, transform_indices = @transform_1, window_bounds = array<i64: 1, 16>}, {pipeline_mode = #tpu.pipeline_mode<synchronous>, transform_indices = @transform_2, window_bounds = array<i64: 16, 128>}, {pipeline_mode = #tpu.pipeline_mode<synchronous>, transform_indices = @transform_3, window_bounds = array<i64: 1, 128>}, {pipeline_mode = #tpu.pipeline_mode<synchronous>, transform_indices = @transform_4, window_bounds = array<i64: 1, 16>}, {pipeline_mode = #tpu.pipeline_mode<synchronous>, transform_indices = @transform_5, window_bounds = array<i64: 1, 16>}, {pipeline_mode = #tpu.pipeline_mode<synchronous>, transform_indices = @transform_6, window_bounds = array<i64: 16, 128>}, {pipeline_mode = #tpu.pipeline_mode<synchronous>, transform_indices = @transform_7, window_bounds = array<i64: 1, 128>}, {transform_indices = @transform_8, window_bounds = array<i64: 2, 128>}, {transform_indices = @transform_9, window_bounds = array<i64: 2, 128>}]} {
    %c0 = arith.constant 0 : index
    %c0_0 = arith.constant 0 : index
    %0 = vector.load %arg1[%c0, %c0_0] : memref<1x16xf32, #tpu.memory_space<vmem>>, vector<1x16xf32>
    %c0_1 = arith.constant 0 : index
    %c0_2 = arith.constant 0 : index
    %1 = vector.load %arg2[%c0_1, %c0_2] : memref<1x16xf32, #tpu.memory_space<vmem>>, vector<1x16xf32>
    %2 = arith.addf %0, %1 : vector<1x16xf32>
    %3 = math.tanh %2 : vector<1x16xf32>
    %c0_3 = arith.constant 0 : index
    %c0_4 = arith.constant 0 : index
    %4 = vector.load %arg3[%c0_3, %c0_4] : memref<16x128xf32, #tpu.memory_space<vmem>>, vector<16x128xf32>
    %cst = arith.constant dense<0.000000e+00> : vector<1x128xf32>
    %5 = tpu.matmul %3, %4, %cst {dimension_numbers = #tpu.dot_dimension_numbers<[1], [0], [0], [1], [0, 0, 1, 1], [], []>} : vector<1x16xf32>, vector<16x128xf32>, vector<1x128xf32> -> vector<1x128xf32>
    %c0_5 = arith.constant 0 : index
    %c0_6 = arith.constant 0 : index
    %6 = vector.load %arg4[%c0_5, %c0_6] : memref<1x128xf32, #tpu.memory_space<vmem>>, vector<1x128xf32>
    %7 = arith.addf %5, %6 : vector<1x128xf32>
    %c0_7 = arith.constant 0 : index
    %c0_8 = arith.constant 0 : index
    %8 = vector.load %arg5[%c0_7, %c0_8] : memref<1x16xf32, #tpu.memory_space<vmem>>, vector<1x16xf32>
    %c0_9 = arith.constant 0 : index
    %c0_10 = arith.constant 0 : index
    %9 = vector.load %arg6[%c0_9, %c0_10] : memref<1x16xf32, #tpu.memory_space<vmem>>, vector<1x16xf32>
    %10 = arith.addf %8, %9 : vector<1x16xf32>
    %11 = math.tanh %10 : vector<1x16xf32>
    %c0_11 = arith.constant 0 : index
    %c0_12 = arith.constant 0 : index
    %12 = vector.load %arg7[%c0_11, %c0_12] : memref<16x128xf32, #tpu.memory_space<vmem>>, vector<16x128xf32>
    %cst_13 = arith.constant dense<0.000000e+00> : vector<1x128xf32>
    %13 = tpu.matmul %11, %12, %cst_13 {dimension_numbers = #tpu.dot_dimension_numbers<[1], [0], [0], [1], [0, 0, 1, 1], [], []>} : vector<1x16xf32>, vector<16x128xf32>, vector<1x128xf32> -> vector<1x128xf32>
    %c0_14 = arith.constant 0 : index
    %c0_15 = arith.constant 0 : index
    %14 = vector.load %arg8[%c0_14, %c0_15] : memref<1x128xf32, #tpu.memory_space<vmem>>, vector<1x128xf32>
    %15 = arith.addf %13, %14 : vector<1x128xf32>
    %16 = math.exp %7 : vector<1x128xf32>
    %c0_16 = arith.constant 0 : index
    %c0_17 = arith.constant 0 : index
    %17 = vector.load %arg9[%c0_16, %c0_17] : memref<2x128xf32, #tpu.memory_space<vmem>>, vector<2x128xf32>
    %18 = vector.broadcast %16 : vector<1x128xf32> to vector<2x128xf32>
    %19 = arith.mulf %18, %17 : vector<2x128xf32>
    %20 = vector.broadcast %15 : vector<1x128xf32> to vector<2x128xf32>
    %21 = arith.addf %19, %20 : vector<2x128xf32>
    %c0_18 = arith.constant 0 : index
    %c0_19 = arith.constant 0 : index
    %22 = vector.load %arg10[%c0_18, %c0_19] : memref<2x128xf32, #tpu.memory_space<vmem>>, vector<2x128xf32>
    tpu.vector_store %arg10[%c0_18, %c0_19], %21 {strides = array<i32>} : memref<2x128xf32, #tpu.memory_space<vmem>>, vector<2x128xf32>,
    return
  }
  func.func @transform_0(%arg0: i32) -> (i32, i32) {
    %c0_i32 = arith.constant 0 : i32
    %c0_i32_0 = arith.constant 0 : i32
    %c0_i32_1 = arith.constant 0 : i32
    return %c0_i32, %c0_i32_0 : i32, i32
  }
  func.func @transform_1(%arg0: i32) -> (i32, i32) {
    %c0_i32 = arith.constant 0 : i32
    %c0_i32_0 = arith.constant 0 : i32
    %c0_i32_1 = arith.constant 0 : i32
    return %c0_i32, %c0_i32_0 : i32, i32
  }
  func.func @transform_2(%arg0: i32) -> (i32, i32) {
    %c0_i32 = arith.constant 0 : i32
    %c0_i32_0 = arith.constant 0 : i32
    %c0_i32_1 = arith.constant 0 : i32
    return %c0_i32, %c0_i32_0 : i32, i32
  }
  func.func @transform_3(%arg0: i32) -> (i32, i32) {
    %c0_i32 = arith.constant 0 : i32
    %c0_i32_0 = arith.constant 0 : i32
    %c0_i32_1 = arith.constant 0 : i32
    return %c0_i32, %c0_i32_0 : i32, i32
  }
  func.func @transform_4(%arg0: i32) -> (i32, i32) {
    %c0_i32 = arith.constant 0 : i32
    %c0_i32_0 = arith.constant 0 : i32
    %c0_i32_1 = arith.constant 0 : i32
    return %c0_i32, %c0_i32_0 : i32, i32
  }
  func.func @transform_5(%arg0: i32) -> (i32, i32) {
    %c0_i32 = arith.constant 0 : i32
    %c0_i32_0 = arith.constant 0 : i32
    %c0_i32_1 = arith.constant 0 : i32
    return %c0_i32, %c0_i32_0 : i32, i32
  }
  func.func @transform_6(%arg0: i32) -> (i32, i32) {
    %c0_i32 = arith.constant 0 : i32
    %c0_i32_0 = arith.constant 0 : i32
    %c0_i32_1 = arith.constant 0 : i32
    return %c0_i32, %c0_i32_0 : i32, i32
  }
  func.func @transform_7(%arg0: i32) -> (i32, i32) {
    %c0_i32 = arith.constant 0 : i32
    %c0_i32_0 = arith.constant 0 : i32
    %c0_i32_1 = arith.constant 0 : i32
    return %c0_i32, %c0_i32_0 : i32, i32
  }
  func.func @transform_8(%arg0: i32) -> (i32, i32) {
    %c0_i32 = arith.constant 0 : i32
    %c0_i32_0 = arith.constant 0 : i32
    return %arg0, %c0_i32 : i32, i32
  }
  func.func @transform_9(%arg0: i32) -> (i32, i32) {
    %c0_i32 = arith.constant 0 : i32
    %c0_i32_0 = arith.constant 0 : i32
    return %arg0, %c0_i32 : i32, i32
  }
}

</mosaic_0001>

<llo_original>
// kernel: tpu_custom_call.1
$region0: #{tpu_custom_call.1}
  #allocation0 [shape = 'u32[]', space=smem, size = 0x4, offset = 0x4, fixed_abs, tag = 'smem constant byte address 0x4 - core index']
  #allocation1 [shape = 'u32[144,128]{1,0:T(1,128)}', space=vmem, size = 0x12000, scoped, tag = 'internal scratch']
  %s0 = inlined_call_operand.hbm [shape: f32[1,16], index: 0, kind: input, shape index: {}]
  %s1 = inlined_call_operand.vmem [shape: f32[1,16], index: 1, kind: input, shape index: {}]
  %s2 = inlined_call_operand.hbm [shape: f32[16,128], index: 2, kind: input, shape index: {}]
  %s3 = inlined_call_operand.vmem [shape: f32[1,128], index: 3, kind: input, shape index: {}]
  %s4 = inlined_call_operand.vmem [shape: f32[1,16], index: 4, kind: input, shape index: {}]
  %s5 = inlined_call_operand.vmem [shape: f32[1,16], index: 5, kind: input, shape index: {}]
  %s6 = inlined_call_operand.vmem [shape: f32[16,128], index: 6, kind: input, shape index: {}]
  %s7 = inlined_call_operand.vmem [shape: f32[1,128], index: 7, kind: input, shape index: {}]
  %s8 = inlined_call_operand.vmem [shape: f32[2,128], index: 8, kind: input, shape index: {}]
  %s9 = inlined_call_operand.hbm [shape: f32[2,128], index: 9, kind: output, shape index: {}]
  %s10 = sld [smem:[#allocation0]]
  $region54: #{tpu_custom_call.1} parent=0
    _
  %s12 = ssub.s32 1, %s10
  %s13 = scalar_select 0, %s12, %s10
  $region1: #{tpu_custom_call.1} parent=0
    #allocation2 [shape = 'u8[512]{0}', space=vmem, size = 0x400, scoped, tag = 'input window, operand 0, single buffered']
    #allocation3 [shape = 's32[1]{0}', space=sflag, size = 0x4, scoped, tag = 'scoped memory for tpu_custom_call.1']
    #allocation4 [shape = 's32[1]{0}', space=sflag, size = 0x4, scoped, tag = 'scoped memory for tpu_custom_call.1']
    #allocation5 [shape = 'u8[8192]{0}', space=vmem, size = 0x2000, scoped, tag = 'input window, operand 2, single buffered']
    #allocation6 [shape = 's32[1]{0}', space=sflag, size = 0x4, scoped, tag = 'scoped memory for tpu_custom_call.1']
    #allocation7 [shape = 'u8[1024]{0}', space=vmem, size = 0x400, scoped, tag = 'output window, operand 0, single buffered']
    %14 = vsyncpa [#allocation3], 0
    %15 = vsyncpa [#allocation6], 0
    %16 = vsyncpa [#allocation4], 0
    // Predicated region
    $region2: #{tpu_custom_call.1} parent=1 // pred_check
      _
    $region3: #{tpu_custom_call.1} parent=1 // pred_check_branch
      %18 = sbr.rel (0) target = $region5
    $region4: #{tpu_custom_call.1} parent=1 // pred_region
      %s20 = ssub.s32 16, 16
      %21 = vsyncadd [#allocation3], %s20
      %s23 = sshll.u32 [#allocation2], 4
      %s24 = int_to_ptr.vmem [resolvable:$true] %s23
      %26 = dma.hbm_to_vmem [thread:$0]  %s0, 16, %s24, [#allocation3]
    $region5: #{tpu_custom_call.1} parent=1 // pred_fallthru
      _
    // Predicated region
    $region6: #{tpu_custom_call.1} parent=1 // pred_check
      _
    $region7: #{tpu_custom_call.1} parent=1 // pred_check_branch
      %28 = sbr.rel (0) target = $region9
    $region8: #{tpu_custom_call.1} parent=1 // pred_region
      _
    $region9: #{tpu_custom_call.1} parent=1 // pred_fallthru
      _
    // Predicated region
    $region10: #{tpu_custom_call.1} parent=1 // pred_check
      _
    $region11: #{tpu_custom_call.1} parent=1 // pred_check_branch
      %30 = sbr.rel (0) target = $region13
    $region12: #{tpu_custom_call.1} parent=1 // pred_region
      %s32 = ssub.s32 256, 256
      %33 = vsyncadd [#allocation6], %s32
      %s34 = sshll.u32 [#allocation5], 4
      %s35 = int_to_ptr.vmem [resolvable:$true] %s34
      %40 = dma.hbm_to_vmem [thread:$0]  %s2, 256, %s35, [#allocation6], 128, 128, 8
    $region13: #{tpu_custom_call.1} parent=1 // pred_fallthru
      _
    // Predicated region
    $region14: #{tpu_custom_call.1} parent=1 // pred_check
      _
    $region15: #{tpu_custom_call.1} parent=1 // pred_check_branch
      %42 = sbr.rel (0) target = $region17
    $region16: #{tpu_custom_call.1} parent=1 // pred_region
      _
    $region17: #{tpu_custom_call.1} parent=1 // pred_fallthru
      _
    // Predicated region
    $region18: #{tpu_custom_call.1} parent=1 // pred_check
      _
    $region19: #{tpu_custom_call.1} parent=1 // pred_check_branch
      %44 = sbr.rel (0) target = $region21
    $region20: #{tpu_custom_call.1} parent=1 // pred_region
      _
    $region21: #{tpu_custom_call.1} parent=1 // pred_fallthru
      _
    // Predicated region
    $region22: #{tpu_custom_call.1} parent=1 // pred_check
      _
    $region23: #{tpu_custom_call.1} parent=1 // pred_check_branch
      %46 = sbr.rel (0) target = $region25
    $region24: #{tpu_custom_call.1} parent=1 // pred_region
      _
    $region25: #{tpu_custom_call.1} parent=1 // pred_fallthru
      _
    // Predicated region
    $region26: #{tpu_custom_call.1} parent=1 // pred_check
      _
    $region27: #{tpu_custom_call.1} parent=1 // pred_check_branch
      %48 = sbr.rel (0) target = $region29
    $region28: #{tpu_custom_call.1} parent=1 // pred_region
      _
    $region29: #{tpu_custom_call.1} parent=1 // pred_fallthru
      _
    // Predicated region
    $region30: #{tpu_custom_call.1} parent=1 // pred_check
      _
    $region31: #{tpu_custom_call.1} parent=1 // pred_check_branch
      %50 = sbr.rel (0) target = $region33
    $region32: #{tpu_custom_call.1} parent=1 // pred_region
      _
    $region33: #{tpu_custom_call.1} parent=1 // pred_fallthru
      _
    // Predicated region
    $region34: #{tpu_custom_call.1} parent=1 // pred_check
      _
    $region35: #{tpu_custom_call.1} parent=1 // pred_check_branch
      %52 = sbr.rel (0) target = $region37
    $region36: #{tpu_custom_call.1} parent=1 // pred_region
      _
    $region37: #{tpu_custom_call.1} parent=1 // pred_fallthru
      _
    // Predicated region
    $region38: #{tpu_custom_call.1} parent=1 // pred_check
      _
    $region39: #{tpu_custom_call.1} parent=1 // pred_check_branch
      %54 = sbr.rel (0) target = $region41
    $region40: #{tpu_custom_call.1} parent=1 // pred_region
      %55 = dma.done [#allocation3], 16
    $region41: #{tpu_custom_call.1} parent=1 // pred_fallthru
      _
    // Predicated region
    $region42: #{tpu_custom_call.1} parent=1 // pred_check
      _
    $region43: #{tpu_custom_call.1} parent=1 // pred_check_branch
      %57 = sbr.rel (0) target = $region45
    $region44: #{tpu_custom_call.1} parent=1 // pred_region
      %58 = dma.done [#allocation6], 256
    $region45: #{tpu_custom_call.1} parent=1 // pred_fallthru
      _
    %v59 = vld [vmem:[#allocation2] sm:$0x1]
    %v60 = vld [vmem:[%s1] sm:$0x1]
    %v61 = vadd.f32 %v59, %v60
    %v62 = vtanh.pop %v61
    %v63 = vld [vmem:[#allocation5] sm:$0xff]
    %v64 = vld [vmem:[#allocation5 + $0x8] sm:$0xff]
    %v65 = vld [vmem:[%s3] sm:$0x1]
    %vm66 = vcmask 130048
    %v68 = vsel %vm66, %v62, 0
    %70 = vmatprep.subr.mxu0 0.0
    %71 = vmatpush1.msra.mxu0 %v63
    %72 = vmatprep.subr.mxu0 0.0
    %73 = vmatpush1.msra.mxu0 %v64
    %74 = vmatprep.subr.mxu0 0.0
    %75 = vmatpush1.msra.mxu0 0.0
    %76 = vmatprep.subr.mxu0 0.0
    %77 = vmatpush1.msra.mxu0 0.0
    %78 = vmatprep.subr.mxu0 0.0
    %79 = vmatpush1.msra.mxu0 0.0
    %80 = vmatprep.subr.mxu0 0.0
    %81 = vmatpush1.msra.mxu0 0.0
    %82 = vmatprep.subr.mxu0 0.0
    %83 = vmatpush1.msra.mxu0 0.0
    %84 = vmatprep.subr.mxu0 0.0
    %85 = vmatpush1.msra.mxu0 0.0
    %86 = vmatprep.subr.mxu0 0.0
    %87 = vmatpush1.msra.mxu0 0.0
    %88 = vmatprep.subr.mxu0 0.0
    %89 = vmatpush1.msra.mxu0 0.0
    %90 = vmatprep.subr.mxu0 0.0
    %91 = vmatpush1.msra.mxu0 0.0
    %92 = vmatprep.subr.mxu0 0.0
    %93 = vmatpush1.msra.mxu0 0.0
    %94 = vmatprep.subr.mxu0 0.0
    %95 = vmatpush1.msra.mxu0 0.0
    %96 = vmatprep.subr.mxu0 0.0
    %97 = vmatpush1.msra.mxu0 0.0
    %98 = vmatprep.subr.mxu0 0.0
    %99 = vmatpush1.msra.mxu0 0.0
    %100 = vmatprep.subr.mxu0 0.0
    %101 = vmatpush1.msra.mxu0 0.0
    %102 = vmatprep.subr.mxu0 0.0
    %103 = vmatpush1.msra.mxu0 0.0
    %104 = vmatprep.subr.mxu0 0.0
    %105 = vmatpush1.msra.mxu0 0.0
    %106 = vmatprep.subr.mxu0 0.0
    %107 = vmatpush1.msra.mxu0 0.0
    %108 = vmatprep.subr.mxu0 0.0
    %109 = vmatpush1.msra.mxu0 0.0
    %110 = vmatprep.subr.mxu0 0.0
    %111 = vmatpush1.msra.mxu0 0.0
    %112 = vmatprep.subr.mxu0 0.0
    %113 = vmatpush1.msra.mxu0 0.0
    %114 = vmatprep.subr.mxu0 0.0
    %115 = vmatpush1.msra.mxu0 0.0
    %116 = vmatprep.subr.mxu0 0.0
    %117 = vmatpush1.msra.mxu0 0.0
    %118 = vmatprep.subr.mxu0 0.0
    %119 = vmatpush1.msra.mxu0 0.0
    %120 = vmatprep.subr.mxu0 0.0
    %121 = vmatpush1.msra.mxu0 0.0
    %122 = vmatprep.subr.mxu0 0.0
    %123 = vmatpush1.msra.mxu0 0.0
    %124 = vmatprep.subr.mxu0 0.0
    %125 = vmatpush1.msra.mxu0 0.0
    %126 = vmatprep.subr.mxu0 0.0
    %127 = vmatpush1.msra.mxu0 0.0
    %128 = vmatprep.subr.mxu0 0.0
    %129 = vmatpush1.msra.mxu0 0.0
    %130 = vmatprep.subr.mxu0 0.0
    %131 = vmatpush1.msra.mxu0 0.0
    %132 = vmatprep.subr.mxu0 0.0
    %133 = vmatpush1.msra.mxu0 0.0
    %134 = vmatprep.mubr.f32.mxu0 0.0
    %135 = vmatmul.mubr.f32.gmra.mrb[0].mxu0 %v68
    %v136 = vpop.f32.mrb[0].mxu0
    %v137 = vadd.f32 %v65, %v136
    %v138 = vpop.f32.mrb[0].mxu0
    %139 = vdwg.mxu0
    %v140 = vld [vmem:[%s4] sm:$0x1]
    %v141 = vld [vmem:[%s5] sm:$0x1]
    %v142 = vadd.f32 %v140, %v141
    %v143 = vtanh.pop %v142
    %v144 = vld [vmem:[%s6] sm:$0xff]
    %v145 = vld [vmem:[%s6 + $0x8] sm:$0xff]
    %v146 = vld [vmem:[%s7] sm:$0x1]
    %v148 = vsel %vm66, %v143, 0
    %150 = vmatprep.subr.mxu0 0.0
    %151 = vmatpush1.msra.mxu0 %v144
    %152 = vmatprep.subr.mxu0 0.0
    %153 = vmatpush1.msra.mxu0 %v145
    %154 = vmatprep.subr.mxu0 0.0
    %155 = vmatpush1.msra.mxu0 0.0
    %156 = vmatprep.subr.mxu0 0.0
    %157 = vmatpush1.msra.mxu0 0.0
    %158 = vmatprep.subr.mxu0 0.0
    %159 = vmatpush1.msra.mxu0 0.0
    %160 = vmatprep.subr.mxu0 0.0
    %161 = vmatpush1.msra.mxu0 0.0
    %162 = vmatprep.subr.mxu0 0.0
    %163 = vmatpush1.msra.mxu0 0.0
    %164 = vmatprep.subr.mxu0 0.0
    %165 = vmatpush1.msra.mxu0 0.0
    %166 = vmatprep.subr.mxu0 0.0
    %167 = vmatpush1.msra.mxu0 0.0
    %168 = vmatprep.subr.mxu0 0.0
    %169 = vmatpush1.msra.mxu0 0.0
    %170 = vmatprep.subr.mxu0 0.0
    %171 = vmatpush1.msra.mxu0 0.0
    %172 = vmatprep.subr.mxu0 0.0
    %173 = vmatpush1.msra.mxu0 0.0
    %174 = vmatprep.subr.mxu0 0.0
    %175 = vmatpush1.msra.mxu0 0.0
    %176 = vmatprep.subr.mxu0 0.0
    %177 = vmatpush1.msra.mxu0 0.0
    %178 = vmatprep.subr.mxu0 0.0
    %179 = vmatpush1.msra.mxu0 0.0
    %180 = vmatprep.subr.mxu0 0.0
    %181 = vmatpush1.msra.mxu0 0.0
    %182 = vmatprep.subr.mxu0 0.0
    %183 = vmatpush1.msra.mxu0 0.0
    %184 = vmatprep.subr.mxu0 0.0
    %185 = vmatpush1.msra.mxu0 0.0
    %186 = vmatprep.subr.mxu0 0.0
    %187 = vmatpush1.msra.mxu0 0.0
    %188 = vmatprep.subr.mxu0 0.0
    %189 = vmatpush1.msra.mxu0 0.0
    %190 = vmatprep.subr.mxu0 0.0
    %191 = vmatpush1.msra.mxu0 0.0
    %192 = vmatprep.subr.mxu0 0.0
    %193 = vmatpush1.msra.mxu0 0.0
    %194 = vmatprep.subr.mxu0 0.0
    %195 = vmatpush1.msra.mxu0 0.0
    %196 = vmatprep.subr.mxu0 0.0
    %197 = vmatpush1.msra.mxu0 0.0
    %198 = vmatprep.subr.mxu0 0.0
    %199 = vmatpush1.msra.mxu0 0.0
    %200 = vmatprep.subr.mxu0 0.0
    %201 = vmatpush1.msra.mxu0 0.0
    %202 = vmatprep.subr.mxu0 0.0
    %203 = vmatpush1.msra.mxu0 0.0
    %204 = vmatprep.subr.mxu0 0.0
    %205 = vmatpush1.msra.mxu0 0.0
    %206 = vmatprep.subr.mxu0 0.0
    %207 = vmatpush1.msra.mxu0 0.0
    %208 = vmatprep.subr.mxu0 0.0
    %209 = vmatpush1.msra.mxu0 0.0
    %210 = vmatprep.subr.mxu0 0.0
    %211 = vmatpush1.msra.mxu0 0.0
    %212 = vmatprep.subr.mxu0 0.0
    %213 = vmatpush1.msra.mxu0 0.0
    %214 = vmatprep.mubr.f32.mxu0 0.0
    %215 = vmatmul.mubr.f32.gmra.mrb[0].mxu0 %v148
    %v216 = vpop.f32.mrb[0].mxu0
    %v217 = vadd.f32 %v146, %v216
    %v218 = vpop.f32.mrb[0].mxu0
    %219 = vdwg.mxu0
    %v220 = vmul.f32 %v137, 1.442695
    %v221 = vpow.pop %v220
    %v222 = vld [vmem:[%s8] sm:$0x3]
    %v223 = vlaneseq
    %v224 = vshrl.u32 %v223, 7
    %v225 = vsub.s32 0, %v224
    %v226 = vrot.slane %v221, %v225
    %v227 = vmul.f32 %v226, %v222
    %v228 = vlaneseq
    %v229 = vshrl.u32 %v228, 7
    %v230 = vsub.s32 0, %v229
    %v231 = vrot.slane %v217, %v230
    %v232 = vadd.f32 %v227, %v231
    %233 = vst [vmem:[#allocation7] sm:$0x3] %v232
    // Predicated region
    $region46: #{tpu_custom_call.1} parent=1 // pred_check
      _
    $region47: #{tpu_custom_call.1} parent=1 // pred_check_branch
      %235 = sbr.rel (0) target = $region49
    $region48: #{tpu_custom_call.1} parent=1 // pred_region
      %s237 = ssub.s32 32, 32
      %238 = vsyncadd [#allocation4], %s237
      %s240 = sshll.u32 [#allocation7], 4
      %s241 = int_to_ptr.vmem [resolvable:$true] %s240
      %243 = dma.vmem_to_hbm [thread:$0]  %s241, 32, %s9, [#allocation4]
    $region49: #{tpu_custom_call.1} parent=1 // pred_fallthru
      _
    // Predicated region
    $region50: #{tpu_custom_call.1} parent=1 // pred_check
      _
    $region51: #{tpu_custom_call.1} parent=1 // pred_check_branch
      %245 = sbr.rel (0) target = $region53
    $region52: #{tpu_custom_call.1} parent=1 // pred_region
      %246 = dma.done [#allocation4], 32
    $region53: #{tpu_custom_call.1} parent=1 // pred_fallthru
      _
    %247 = vsyncpa [#allocation3], 1
    %248 = vsyncpa [#allocation6], 1
    %249 = vsyncpa [#allocation4], 1

</llo_original>
